<compile_context>
chip_gen: v7x
topology: tpu7x:2x2x1
jax: 0.10.0
libtpu: 0.0.40
codegen_flags: <defaults>
</compile_context>

<pallas_src>
import functools

import jax
import jax.numpy as jnp
from jax import lax
from jax.experimental import pallas as pl
from jax.experimental.pallas import tpu as pltpu

# Per-step, per-batch-element VMEM budget target (x slab + score column + mask
# + softmax intermediates). 8 MiB keeps the double-buffered total well under
# the scoped limit below on v5e/v6e (128 MiB physical) and v7x (64 MiB).
_TARGET_STEP_BYTES = 8 << 20
_VMEM_LIMIT_BYTES = 48 << 20
_MIN_GRID_STEPS = 4  # never emit a 1-step grid: no DMA/compute overlap, idle v7x TC


def _choose_batch_tile(batch: int, bytes_per_batch: int) -> int:
    """Pick TB: biggest per-step batch slab that fits the budget, with >= ~4
    pipelined grid steps and (preferably) an even step count for v7x's 2 TCs."""
    cap = int(max(1, _TARGET_STEP_BYTES // max(1, bytes_per_batch)))
    cap = min(cap, max(1, batch // _MIN_GRID_STEPS))
    if cap <= 1:
        return 1
    # Prefer an exact divisor of `batch` (no padding => no extra HBM traffic),
    # but only if it stays within ~2x of the budget; among those prefer an even
    # number of grid steps so both v7x TensorCores get equal work.
    divs = [t for t in range(1, cap + 1) if batch % t == 0]
    good = [t for t in divs if 2 * t >= cap]
    if good:
        even = [t for t in good if (batch // t) % 2 == 0]
        return max(even) if even else max(good)
    return cap  # fall back: pad the batch up to a multiple of `cap`.


def _attn_pool_kernel(*refs, has_mask: bool, flat_scores: bool):
    if has_mask:
        q_ref, x_ref, mask_ref, o_ref = refs
    else:
        q_ref, x_ref, o_ref = refs
        mask_ref = None

    x = x_ref[...]                                   # (TB, F, d)
    tb, f, d = x.shape
    q = q_ref[...]                                   # (d, 1), shared

    # scores[b, f] = sum_d x[b, f, d] * q[d]
    if flat_scores:
        # Single 2D MXU matmul on the flattened slab: query weights are loaded
        # into the MXU once per grid step (no per-batch broadcast/reload).
        # The reshapes only regroup whole sublane tiles (F % 8 == 0) -> free.
        s_col = jnp.dot(x.reshape(tb * f, d), q,
                        preferred_element_type=jnp.float32)       # (TB*F, 1)
        s_col = s_col.reshape(tb, f, 1)                           # (TB, F, 1)
    else:
        # Fallback when F % 8 != 0: batched canonical matmul with a broadcast
        # query (still never transposes the big x tile).
        qb = jnp.broadcast_to(q.reshape(1, d, 1), (tb, d, 1))
        s_col = lax.dot_general(
            x, qb, (((2,), (1,)), ((0,), (0,))),
            preferred_element_type=jnp.float32)                   # (TB, F, 1)

    # Re-layout the tiny lane-sparse (F, 1) per-batch score column into a
    # lane-dense (1, F) row by contracting its size-1 dim against ones
    # -- O(F) work instead of an O(F*d) transpose of x.
    ones = jnp.ones((tb, 1, 1), dtype=jnp.float32)
    scores = lax.dot_general(
        ones, s_col, (((2,), (2,)), ((0,), (0,))),
        preferred_element_type=jnp.float32)                       # (TB, 1, F)

    if mask_ref is not None:
        scores = jnp.where(mask_ref[...] != 0, jnp.float32(-jnp.inf), scores)

    # Numerically stable softmax over F (the lane axis). exp(-inf) == 0 already
    # zeroes masked weights, so no second `where` is needed. A fully-masked row
    # yields NaN, matching PyTorch softmax-of-all(-inf).
    s_max = jnp.max(scores, axis=-1, keepdims=True)               # (TB, 1, 1)
    e = jnp.exp(scores - s_max)
    denom = jnp.sum(e, axis=-1, keepdims=True)                    # (TB, 1, 1)
    # Exact divide: the EUP cost is hidden under the HBM stream, and it removes
    # the ~1e-3 error of the approximate reciprocal (perf-review concern).
    w = e / denom                                                 # (TB, 1, F)

    # attention_output[b] = w[b] @ x[b]: canonical batched matmul. When x is
    # f32 the weights stay f32; for bf16 x they are rounded to bf16 to keep a
    # single MXU operand dtype (documented extra rounding vs the f32 reference).
    out = lax.dot_general(
        w.astype(x.dtype), x, (((2,), (1,)), ((0,), (0,))),
        preferred_element_type=jnp.float32)                       # (TB, 1, d)
    o_ref[...] = out.astype(o_ref.dtype)


@jax.jit
def global_attention_pool1d(x, query, mask=None):
    """x: (B, F, d); query: (1, d); mask: optional (B, 1, F) (nonzero = masked).

    Returns (B, d): masked-softmax attention pooling over F with a learned query.
    """
    B, F, d = x.shape
    itemsize = jnp.dtype(x.dtype).itemsize
    has_mask = mask is not None

    # Per-batch VMEM footprint of one grid step: the streamed x slab, the
    # 128x lane-padded (F, 1) f32 score column the N=1 MXU matmul produces
    # (512 B per score -- the binding constraint on v7x when d is small),
    # ~3 small (1, F) f32 softmax intermediates, and the sublane-padded int8
    # mask block.
    per_batch = F * d * itemsize + F * 4 * 128 + F * 128
    if has_mask:
        per_batch += F * 32

    # TODO(synk): stream F with an online softmax (second "arbitrary" grid axis
    # + m/l/acc scratch) once 2*F*d*itemsize + F*512 exceeds ~24 MiB -- the
    # single-slab design hits v7x's 64 MiB VMEM wall at half the sequence
    # length of v5e/v6e, and B == 1 currently still yields a 1-step grid.
    tb = _choose_batch_tile(B, per_batch)
    b_pad = pl.cdiv(B, tb) * tb

    if b_pad != B:
        x = jnp.pad(x, ((0, b_pad - B), (0, 0), (0, 0)))

    q_col = query.astype(x.dtype).reshape(d, 1)
    flat_scores = (F % 8 == 0)

    in_specs = [
        pl.BlockSpec((d, 1), lambda b: (0, 0)),              # query (shared)
        pl.BlockSpec((tb, F, d), lambda b: (b, 0, 0)),       # x, TB per step
    ]
    args = [q_col, x]
    if has_mask:
        mask = jnp.reshape(mask, (B, 1, F))
        mask8 = (mask != 0).astype(jnp.int8)                 # 1 byte/token HBM
        if b_pad != B:
            mask8 = jnp.pad(mask8, ((0, b_pad - B), (0, 0), (0, 0)))
        in_specs.append(pl.BlockSpec((tb, 1, F), lambda b: (b, 0, 0)))
        args.append(mask8)

    out = pl.pallas_call(
        functools.partial(_attn_pool_kernel,
                          has_mask=has_mask, flat_scores=flat_scores),
        out_shape=jax.ShapeDtypeStruct((b_pad, 1, d), x.dtype),
        grid_spec=pltpu.PrefetchScalarGridSpec(
            num_scalar_prefetch=0,
            grid=(b_pad // tb,),
            in_specs=in_specs,
            out_specs=pl.BlockSpec((tb, 1, d), lambda b: (b, 0, 0)),
        ),
        compiler_params=pltpu.CompilerParams(
            dimension_semantics=("parallel",),
            vmem_limit_bytes=_VMEM_LIMIT_BYTES),
    )(*args)
    # Output traffic is <1% of x traffic, so the final squeeze is a free XLA
    # reshape here instead of an in-kernel relayout of the (TB, 1, d) block.
    return out[:B, 0, :]


def _reference(x, query, mask=None):
    # Pure-JAX reference mirroring the PyTorch forward exactly (f32, HIGHEST
    # matmul precision so the comparison is against true f32 math).
    B, F, d = x.shape
    if mask is None:
        mask = jnp.zeros((B, 1, F), dtype=bool)
    scores = jnp.swapaxes(
        jnp.matmul(x, query.T, precision=lax.Precision.HIGHEST), -1, -2)
    scores = jnp.where(mask, -jnp.inf, scores)
    w = jax.nn.softmax(scores, axis=-1)
    w = jnp.where(mask, 0.0, w)
    out = jnp.matmul(w, x, precision=lax.Precision.HIGHEST)     # (B, 1, d)
    return out[:, 0, :]


if __name__ == "__main__":
    B, F, d_model = 2, 8, 32

    key = jax.random.PRNGKey(0)
    kq, kx = jax.random.split(key, 2)

    # nn.init.normal_(query, mean=0, std=0.02)
    query = 0.02 * jax.random.normal(kq, (1, d_model), dtype=jnp.float32)
    x = jax.random.normal(kx, (B, F, d_model), dtype=jnp.float32)

    # Exact softmax normalization in-kernel -> tight tolerances.
    tol = dict(atol=1e-5, rtol=1e-4)

    # Case 1: default mask (None) -- no mask array is read at all.
    out = jax.block_until_ready(global_attention_pool1d(x, query))
    ref = _reference(x, query)
    assert out.shape == (B, d_model)
    assert jnp.allclose(out, ref, **tol)

    # Case 2: explicit boolean mask (mask out last 3 tokens of batch 1).
    mask = jnp.zeros((B, 1, F), dtype=bool).at[1, 0, -3:].set(True)
    out_m = jax.block_until_ready(global_attention_pool1d(x, query, mask))
    ref_m = _reference(x, query, mask)
    assert out_m.shape == (B, d_model)
    assert jnp.allclose(out_m, ref_m, **tol)

    print("KERNEL_OK")
</pallas_src>

<mosaic_0001>
module attributes {stable_mosaic.version = 11 : i64} {
  func.func @_attn_pool_kernel(%arg0: i32, %arg1: memref<32x1xf32, #tpu.memory_space<vmem>>, %arg2: memref<1x8x32xf32, #tpu.memory_space<vmem>>, %arg3: memref<1x1x32xf32, #tpu.memory_space<vmem>>) attributes {dimension_semantics = [#tpu.dimension_semantics<parallel>], iteration_bounds = array<i64: 2>, scalar_prefetch = 0 : i64, scratch_operands = 0 : i64, tpu.core_type = #tpu.core_type<tc>, window_params = [{pipeline_mode = #tpu.pipeline_mode<synchronous>, transform_indices = @transform_0, window_bounds = array<i64: 32, 1>}, {transform_indices = @transform_1, window_bounds = array<i64: 1, 8, 32>}, {transform_indices = @transform_2, window_bounds = array<i64: 1, 1, 32>}]} {
    %c0 = arith.constant 0 : index
    %c0_0 = arith.constant 0 : index
    %c0_1 = arith.constant 0 : index
    %0 = vector.load %arg2[%c0, %c0_0, %c0_1] : memref<1x8x32xf32, #tpu.memory_space<vmem>>, vector<1x8x32xf32>
    %c0_2 = arith.constant 0 : index
    %c0_3 = arith.constant 0 : index
    %1 = vector.load %arg1[%c0_2, %c0_3] : memref<32x1xf32, #tpu.memory_space<vmem>>, vector<32x1xf32>
    %2 = vector.shape_cast %0 : vector<1x8x32xf32> to vector<8x32xf32>
    %cst = arith.constant dense<0.000000e+00> : vector<8x1xf32>
    %3 = tpu.matmul %2, %1, %cst {dimension_numbers = #tpu.dot_dimension_numbers<[1], [0], [0], [1], [0, 0, 1, 1], [], []>} : vector<8x32xf32>, vector<32x1xf32>, vector<8x1xf32> -> vector<8x1xf32>
    %4 = vector.shape_cast %3 : vector<8x1xf32> to vector<1x8x1xf32>
    %cst_4 = arith.constant 1.000000e+00 : f32
    %5 = vector.broadcast %cst_4 : f32 to vector<1x1x1xf32>
    %cst_5 = arith.constant dense<0.000000e+00> : vector<1x1x8xf32>
    %6 = tpu.matmul %5, %4, %cst_5 {dimension_numbers = #tpu.dot_dimension_numbers<[2], [2], [1], [1], [0, 0, 0, 1, 1, 1], [0], [0]>} : vector<1x1x1xf32>, vector<1x8x1xf32>, vector<1x1x8xf32> -> vector<1x1x8xf32>
    %cst_6 = arith.constant dense<0xFF800000> : vector<1x1xf32>
    %7 = vector.multi_reduction <maximumf>, %6, %cst_6 [2] : vector<1x1x8xf32> to vector<1x1xf32>
    %8 = vector.shape_cast %7 : vector<1x1xf32> to vector<1x1x1xf32>
    %9 = vector.broadcast %8 : vector<1x1x1xf32> to vector<1x1x8xf32>
    %10 = arith.subf %6, %9 : vector<1x1x8xf32>
    %11 = math.exp %10 : vector<1x1x8xf32>
    %cst_7 = arith.constant dense<0.000000e+00> : vector<1x1xf32>
    %12 = vector.multi_reduction <add>, %11, %cst_7 [2] : vector<1x1x8xf32> to vector<1x1xf32>
    %13 = vector.shape_cast %12 : vector<1x1xf32> to vector<1x1x1xf32>
    %14 = vector.broadcast %13 : vector<1x1x1xf32> to vector<1x1x8xf32>
    %15 = arith.divf %11, %14 : vector<1x1x8xf32>
    %cst_8 = arith.constant dense<0.000000e+00> : vector<1x1x32xf32>
    %16 = tpu.matmul %15, %0, %cst_8 {dimension_numbers = #tpu.dot_dimension_numbers<[2], [1], [1], [2], [0, 0, 0, 1, 1, 2], [0], [0]>} : vector<1x1x8xf32>, vector<1x8x32xf32>, vector<1x1x32xf32> -> vector<1x1x32xf32>
    %c0_9 = arith.constant 0 : index
    %c0_10 = arith.constant 0 : index
    %c0_11 = arith.constant 0 : index
    %17 = vector.load %arg3[%c0_9, %c0_10, %c0_11] : memref<1x1x32xf32, #tpu.memory_space<vmem>>, vector<1x1x32xf32>
    tpu.vector_store %arg3[%c0_9, %c0_10, %c0_11], %16 {strides = array<i32>} : memref<1x1x32xf32, #tpu.memory_space<vmem>>, vector<1x1x32xf32>,
    return
  }
  func.func @transform_0(%arg0: i32) -> (i32, i32) {
    %c0_i32 = arith.constant 0 : i32
    %c0_i32_0 = arith.constant 0 : i32
    %c0_i32_1 = arith.constant 0 : i32
    return %c0_i32, %c0_i32_0 : i32, i32
  }
  func.func @transform_1(%arg0: i32) -> (i32, i32, i32) {
    %c0_i32 = arith.constant 0 : i32
    %c0_i32_0 = arith.constant 0 : i32
    %c0_i32_1 = arith.constant 0 : i32
    return %arg0, %c0_i32, %c0_i32_0 : i32, i32, i32
  }
  func.func @transform_2(%arg0: i32) -> (i32, i32, i32) {
    %c0_i32 = arith.constant 0 : i32
    %c0_i32_0 = arith.constant 0 : i32
    %c0_i32_1 = arith.constant 0 : i32
    return %arg0, %c0_i32, %c0_i32_0 : i32, i32, i32
  }
}

</mosaic_0001>

<llo_original>
// kernel: global_attention_pool1d.1
$region0: #{global_attention_pool1d.1}
  #allocation0 [shape = 'u32[]', space=smem, size = 0x4, offset = 0x4, fixed_abs, tag = 'smem constant byte address 0x4 - core index']
  #allocation1 [shape = 'u32[144,128]{1,0:T(1,128)}', space=vmem, size = 0x12000, scoped, tag = 'internal scratch']
  %s0 = inlined_call_operand.vmem [shape: f32[32,1], index: 0, kind: input, shape index: {}]
  %s1 = inlined_call_operand.vmem [shape: f32[2,8,32], index: 1, kind: input, shape index: {}]
  %s2 = inlined_call_operand.hbm [shape: f32[2,1,32], index: 2, kind: output, shape index: {}]
  %s3 = sld [smem:[#allocation0]]
  $region41: #{global_attention_pool1d.1} parent=0
    _
  %s5 = ssub.s32 1, %s3
  %s6 = scalar_select 0, %s5, %s3
  $region1: #{global_attention_pool1d.1} parent=0
    #allocation2 [shape = 'u8[1024]{0}', space=vmem, size = 0x400, scoped, tag = 'output window, operand 0']
    #allocation3 [shape = 's32[2]{0}', space=sflag, size = 0x8, scoped, tag = 'scoped memory for global_attention_pool1d.1']
    %7 = vsyncpa [#allocation3], 0
    %s8 = scalar_lea.sflag [#allocation3], 1
    %9 = vsyncpa %s8, 0
    loop: start=0, step=1, limit=4
    $region2: #{global_attention_pool1d.1} parent=1 // loop_pre_header
      _
    $region3: #{global_attention_pool1d.1} parent=1 // loop_header
      %s11 = sphi 0, %s15
      %p12 = scmp.ge.s32.totalorder %s11, 4
      %s19 = sphi 0, %s19
      %s21 = sphi 0, %s19
      %s22 = sphi 0, %s21
      %s36 = sphi 0, %s22
      %s42 = sphi 0, %s44
      %s45 = sphi 0, %s42
      %s46 = sphi 0, %s45
      %s62 = sphi 0, %s46
      %s68 = sphi 0, %s70
      %s71 = sphi 0, %s68
      %s72 = sphi 0, %s71
      %s88 = sphi 0, %s72
    $region4: #{global_attention_pool1d.1} parent=1 // loop_header_branch
      %14 = sbr.rel (%p12) target = $region8
    $region5: #{global_attention_pool1d.1} parent=1 // loop_body
      %s16 = ssub.s32 %s11, 1
      %s17 = ssub.s32 %s11, 2
      %s18 = sadd.s32 %s11, 1
      %s20 = sadd.s32 %s19, 1
      %p23 = scmp.eq.s32.totalorder %s11, 1
      %p24 = scmp.ne.s32.totalorder %s19, %s21
      %p25 = scmp.eq.s32.totalorder %s11, 0
      %p26 = por %p24, %p25
      %p27 = scmp.ne.s32.totalorder %s19, %s21
      %p28 = scmp.eq.s32.totalorder %s16, 1
      %p29 = por %p27, %p28
      %p30 = scmp.ne.s32.totalorder %s21, %s22
      %p31 = scmp.eq.s32.totalorder %s16, 0
      %p32 = por %p30, %p31
      %p33 = scmp.ne.s32.totalorder %s21, %s22
      %p34 = scmp.eq.s32.totalorder %s17, 1
      %p35 = por %p33, %p34
      %p37 = scmp.ne.s32.totalorder %s22, %s36
      %p38 = scmp.eq.s32.totalorder %s17, 0
      %p39 = por %p37, %p38
      %s40 = ssub.s32 %s11, %s18
      %p41 = scmp.eq.s32.totalorder %s40, 0
      %s43 = sadd.s32 %s42, 1
      %s44 = scalar_select %p41, %s42, %s43
      %p47 = pneg %p41
      %p48 = scmp.eq.s32.totalorder %s11, 1
      %p49 = por %p47, %p48
      %p50 = scmp.ne.s32.totalorder %s42, %s45
      %p51 = scmp.eq.s32.totalorder %s11, 0
      %p52 = por %p50, %p51
      %p53 = scmp.ne.s32.totalorder %s42, %s45
      %p54 = scmp.eq.s32.totalorder %s16, 1
      %p55 = por %p53, %p54
      %p56 = scmp.ne.s32.totalorder %s45, %s46
      %p57 = scmp.eq.s32.totalorder %s16, 0
      %p58 = por %p56, %p57
      %p59 = scmp.ne.s32.totalorder %s45, %s46
      %p60 = scmp.eq.s32.totalorder %s17, 1
      %p61 = por %p59, %p60
      %p63 = scmp.ne.s32.totalorder %s46, %s62
      %p64 = scmp.eq.s32.totalorder %s17, 0
      %p65 = por %p63, %p64
      %s66 = ssub.s32 %s11, %s18
      %p67 = scmp.eq.s32.totalorder %s66, 0
      %s69 = sadd.s32 %s68, 1
      %s70 = scalar_select %p67, %s68, %s69
      %p73 = pneg %p67
      %p74 = scmp.eq.s32.totalorder %s11, 1
      %p75 = por %p73, %p74
      %p76 = scmp.ne.s32.totalorder %s68, %s71
      %p77 = scmp.eq.s32.totalorder %s11, 0
      %p78 = por %p76, %p77
      %p79 = scmp.ne.s32.totalorder %s68, %s71
      %p80 = scmp.eq.s32.totalorder %s16, 1
      %p81 = por %p79, %p80
      %p82 = scmp.ne.s32.totalorder %s71, %s72
      %p83 = scmp.eq.s32.totalorder %s16, 0
      %p84 = por %p82, %p83
      %p85 = scmp.ne.s32.totalorder %s71, %s72
      %p86 = scmp.eq.s32.totalorder %s17, 1
      %p87 = por %p85, %p86
      %p89 = scmp.ne.s32.totalorder %s72, %s88
      %p90 = scmp.eq.s32.totalorder %s17, 0
      %p91 = por %p89, %p90
      %p92 = scmp.le.s32.totalorder 1, %s11
      %p93 = scmp.lt.s32.totalorder %s11, 3
      %p94 = pnand %p92, %p93
      %p95 = pneg %p94
      // Predicated region
      $region9: #{global_attention_pool1d.1} parent=5 // pred_check
        _
      $region10: #{global_attention_pool1d.1} parent=5 // pred_check_branch
        %97 = sbr.rel (%p94) target = $region12
      $region11: #{global_attention_pool1d.1} parent=5 // pred_region
        %s98 = ssub.s32 %s11, 1
        // Predicated region
        $region13: #{global_attention_pool1d.1} parent=11 // pred_check
          %p99 = pneg %p32
        $region14: #{global_attention_pool1d.1} parent=11 // pred_check_branch
          %101 = sbr.rel (%p99) target = $region16
        $region15: #{global_attention_pool1d.1} parent=11 // pred_region
          _
        $region16: #{global_attention_pool1d.1} parent=11 // pred_fallthru
          _
      $region12: #{global_attention_pool1d.1} parent=5 // pred_fallthru
        _
      %p102 = scmp.lt.s32.totalorder %s11, 2
      // Predicated region
      $region17: #{global_attention_pool1d.1} parent=5 // pred_check
        %p103 = pneg %p102
      $region18: #{global_attention_pool1d.1} parent=5 // pred_check_branch
        %105 = sbr.rel (%p103) target = $region20
      $region19: #{global_attention_pool1d.1} parent=5 // pred_region
        // Predicated region
        $region21: #{global_attention_pool1d.1} parent=19 // pred_check
          %p106 = pneg %p52
        $region22: #{global_attention_pool1d.1} parent=19 // pred_check_branch
          %108 = sbr.rel (%p106) target = $region24
        $region23: #{global_attention_pool1d.1} parent=19 // pred_region
          %p109 = scmp.lt.s32.totalorder %s11, 1
          %s110 = scalar_select %p109, %s11, 1
          %s111 = smul.addr %s110, 8
          %s112 = scalar_lea.vmem %s1, %s111
        $region24: #{global_attention_pool1d.1} parent=19 // pred_fallthru
          _
      $region20: #{global_attention_pool1d.1} parent=5 // pred_fallthru
        _
      %p113 = scmp.le.s32.totalorder 1, %s11
      %p114 = scmp.lt.s32.totalorder %s11, 3
      %p115 = pnand %p113, %p114
      %p116 = pneg %p115
      // Predicated region
      $region25: #{global_attention_pool1d.1} parent=5 // pred_check
        _
      $region26: #{global_attention_pool1d.1} parent=5 // pred_check_branch
        %118 = sbr.rel (%p115) target = $region28
      $region27: #{global_attention_pool1d.1} parent=5 // pred_region
        %s119 = ssub.s32 %s11, 1
        %p120 = pneg %p32
        %p121 = pneg %p29
        %p122 = scmp.lt.s32.totalorder %s16, 1
        %s123 = scalar_select %p122, %s16, 1
        %s124 = smul.addr %s123, 8
        %s125 = scalar_lea.vmem %s1, %s124
        %p126 = pneg %p58
        %p127 = pneg %p55
        %p128 = pneg %p84
        %p129 = pneg %p81
        %s130 = sand.u32 %s71, 1
        %s131 = scalar_lea.sflag [#allocation3], %s130
        %s132 = sand.u32 %s71, 1
        %s133 = scalar_lea.vmem [#allocation2], %s132
        %p134 = scmp.lt.s32.totalorder %s16, 1
        %s135 = scalar_select %p134, %s16, 1
        %s136 = smul.addr %s135, 8
        %s137 = scalar_lea.vmem %s1, %s136
        %v138 = vld [vmem:[%s137] sm:$0xff]
        %v139 = vld [vmem:[%s0] sm:$0xff]
        %v140 = vld [vmem:[%s0 + $0x8] sm:$0xff]
        %v141 = vld [vmem:[%s0 + $0x10] sm:$0xff]
        %v142 = vld [vmem:[%s0 + $0x18] sm:$0xff]
        %vm143 = vcmask 261120
        %v145 = vsel %vm143, %v138, 0
        %147 = vmatprep.subr.mxu0 0.0
        %148 = vmatpush1.msra.mxu0 %v139
        %149 = vmatprep.subr.mxu0 0.0
        %150 = vmatpush1.msra.mxu0 %v140
        %151 = vmatprep.subr.mxu0 0.0
        %152 = vmatpush1.msra.mxu0 %v141
        %153 = vmatprep.subr.mxu0 0.0
        %154 = vmatpush1.msra.mxu0 %v142
        %155 = vmatprep.subr.mxu0 0.0
        %156 = vmatpush1.msra.mxu0 0.0
        %157 = vmatprep.subr.mxu0 0.0
        %158 = vmatpush1.msra.mxu0 0.0
        %159 = vmatprep.subr.mxu0 0.0
        %160 = vmatpush1.msra.mxu0 0.0
        %161 = vmatprep.subr.mxu0 0.0
        %162 = vmatpush1.msra.mxu0 0.0
        %163 = vmatprep.subr.mxu0 0.0
        %164 = vmatpush1.msra.mxu0 0.0
        %165 = vmatprep.subr.mxu0 0.0
        %166 = vmatpush1.msra.mxu0 0.0
        %167 = vmatprep.subr.mxu0 0.0
        %168 = vmatpush1.msra.mxu0 0.0
        %169 = vmatprep.subr.mxu0 0.0
        %170 = vmatpush1.msra.mxu0 0.0
        %171 = vmatprep.subr.mxu0 0.0
        %172 = vmatpush1.msra.mxu0 0.0
        %173 = vmatprep.subr.mxu0 0.0
        %174 = vmatpush1.msra.mxu0 0.0
        %175 = vmatprep.subr.mxu0 0.0
        %176 = vmatpush1.msra.mxu0 0.0
        %177 = vmatprep.subr.mxu0 0.0
        %178 = vmatpush1.msra.mxu0 0.0
        %179 = vmatprep.subr.mxu0 0.0
        %180 = vmatpush1.msra.mxu0 0.0
        %181 = vmatprep.subr.mxu0 0.0
        %182 = vmatpush1.msra.mxu0 0.0
        %183 = vmatprep.subr.mxu0 0.0
        %184 = vmatpush1.msra.mxu0 0.0
        %185 = vmatprep.subr.mxu0 0.0
        %186 = vmatpush1.msra.mxu0 0.0
        %187 = vmatprep.subr.mxu0 0.0
        %188 = vmatpush1.msra.mxu0 0.0
        %189 = vmatprep.subr.mxu0 0.0
        %190 = vmatpush1.msra.mxu0 0.0
        %191 = vmatprep.subr.mxu0 0.0
        %192 = vmatpush1.msra.mxu0 0.0
        %193 = vmatprep.subr.mxu0 0.0
        %194 = vmatpush1.msra.mxu0 0.0
        %195 = vmatprep.subr.mxu0 0.0
        %196 = vmatpush1.msra.mxu0 0.0
        %197 = vmatprep.subr.mxu0 0.0
        %198 = vmatpush1.msra.mxu0 0.0
        %199 = vmatprep.subr.mxu0 0.0
        %200 = vmatpush1.msra.mxu0 0.0
        %201 = vmatprep.subr.mxu0 0.0
        %202 = vmatpush1.msra.mxu0 0.0
        %203 = vmatprep.subr.mxu0 0.0
        %204 = vmatpush1.msra.mxu0 0.0
        %205 = vmatprep.subr.mxu0 0.0
        %206 = vmatpush1.msra.mxu0 0.0
        %207 = vmatprep.subr.mxu0 0.0
        %208 = vmatpush1.msra.mxu0 0.0
        %209 = vmatprep.subr.mxu0 0.0
        %210 = vmatpush1.msra.mxu0 0.0
        %211 = vmatprep.mubr.f32.mxu0 0.0
        %212 = vmatmul.mubr.f32.gmra.mrb[0].mxu0 %v145
        %v213 = vpop.f32.mrb[0].mxu0
        %v214 = vadd.f32 0.0, %v213
        %v215 = vpop.f32.mrb[0].mxu0
        %216 = vdwg.mxu0
        %vm217 = vcmask 7168
        %v219 = vsel %vm217, 1.0, 0
        %v222 = vsel %vm217, %v214, 0
        %224 = vmatprep.subr.mxu0 0.0
        %225 = vmatpush1.xpose.msra.mxu0 %v222
        %226 = vmatprep.subr.mxu0 0.0
        %227 = vmatpush1.xpose.msra.mxu0 0.0
        %228 = vmatprep.subr.mxu0 0.0
        %229 = vmatpush1.xpose.msra.mxu0 0.0
        %230 = vmatprep.subr.mxu0 0.0
        %231 = vmatpush1.xpose.msra.mxu0 0.0
        %232 = vmatprep.subr.mxu0 0.0
        %233 = vmatpush1.xpose.msra.mxu0 0.0
        %234 = vmatprep.subr.mxu0 0.0
        %235 = vmatpush1.xpose.msra.mxu0 0.0
        %236 = vmatprep.subr.mxu0 0.0
        %237 = vmatpush1.xpose.msra.mxu0 0.0
        %238 = vmatprep.subr.mxu0 0.0
        %239 = vmatpush1.xpose.msra.mxu0 0.0
        %240 = vmatprep.subr.mxu0 0.0
        %241 = vmatpush1.xpose.msra.mxu0 0.0
        %242 = vmatprep.subr.mxu0 0.0
        %243 = vmatpush1.xpose.msra.mxu0 0.0
        %244 = vmatprep.subr.mxu0 0.0
        %245 = vmatpush1.xpose.msra.mxu0 0.0
        %246 = vmatprep.subr.mxu0 0.0
        %247 = vmatpush1.xpose.msra.mxu0 0.0
        %248 = vmatprep.subr.mxu0 0.0
        %249 = vmatpush1.xpose.msra.mxu0 0.0
        %250 = vmatprep.subr.mxu0 0.0
        %251 = vmatpush1.xpose.msra.mxu0 0.0
        %252 = vmatprep.subr.mxu0 0.0
        %253 = vmatpush1.xpose.msra.mxu0 0.0
        %254 = vmatprep.subr.mxu0 0.0
        %255 = vmatpush1.xpose.msra.mxu0 0.0
        %256 = vmatprep.subr.mxu0 0.0
        %257 = vmatpush1.xpose.msra.mxu0 0.0
        %258 = vmatprep.subr.mxu0 0.0
        %259 = vmatpush1.xpose.msra.mxu0 0.0
        %260 = vmatprep.subr.mxu0 0.0
        %261 = vmatpush1.xpose.msra.mxu0 0.0
        %262 = vmatprep.subr.mxu0 0.0
        %263 = vmatpush1.xpose.msra.mxu0 0.0
        %264 = vmatprep.subr.mxu0 0.0
        %265 = vmatpush1.xpose.msra.mxu0 0.0
        %266 = vmatprep.subr.mxu0 0.0
        %267 = vmatpush1.xpose.msra.mxu0 0.0
        %268 = vmatprep.subr.mxu0 0.0
        %269 = vmatpush1.xpose.msra.mxu0 0.0
        %270 = vmatprep.subr.mxu0 0.0
        %271 = vmatpush1.xpose.msra.mxu0 0.0
        %272 = vmatprep.subr.mxu0 0.0
        %273 = vmatpush1.xpose.msra.mxu0 0.0
        %274 = vmatprep.subr.mxu0 0.0
        %275 = vmatpush1.xpose.msra.mxu0 0.0
        %276 = vmatprep.subr.mxu0 0.0
        %277 = vmatpush1.xpose.msra.mxu0 0.0
        %278 = vmatprep.subr.mxu0 0.0
        %279 = vmatpush1.xpose.msra.mxu0 0.0
        %280 = vmatprep.subr.mxu0 0.0
        %281 = vmatpush1.xpose.msra.mxu0 0.0
        %282 = vmatprep.subr.mxu0 0.0
        %283 = vmatpush1.xpose.msra.mxu0 0.0
        %284 = vmatprep.subr.mxu0 0.0
        %285 = vmatpush1.xpose.msra.mxu0 0.0
        %286 = vmatprep.subr.mxu0 0.0
        %287 = vmatpush1.xpose.msra.mxu0 0.0
        %288 = vmatprep.mubr.f32.mxu0 0.0
        %289 = vmatmul.mubr.f32.gmra.mrb[0].mxu0 %v219
        %v290 = vpop.f32.mrb[0].mxu0
        %v291 = vadd.f32 0.0, %v290
        %v292 = vpop.f32.mrb[0].mxu0
        %293 = vdwg.mxu0
        %vm294 = vcmask 57344
        %v295 = vsel %vm294, %v291, -inf
        %296 = vmax.xlane.f32.xlu0 %v295
        %v297 = vpop.xlane.xlu0 %296
        %v298 = vsub.f32 %v291, %v297
        %v299 = vmul.f32 %v298, 1.442695
        %v300 = vpow.pop %v299
        %v301 = vsel %vm294, %v300, 0.0
        %302 = vadd.xlane.f32.xlu0 %v301
        %v303 = vpop.xlane.xlu0 %302
        %v304 = vrcp.pop %v303
        %v305 = vmul.f32 %v300, %v304
        %vm306 = vcmask 64512
        %v308 = vsel %vm306, %v305, 0
        %310 = vmatprep.subr.mxu0 0.0
        %311 = vmatpush1.msra.mxu0 %v138
        %312 = vmatprep.subr.mxu0 0.0
        %313 = vmatpush1.msra.mxu0 0.0
        %314 = vmatprep.subr.mxu0 0.0
        %315 = vmatpush1.msra.mxu0 0.0
        %316 = vmatprep.subr.mxu0 0.0
        %317 = vmatpush1.msra.mxu0 0.0
        %318 = vmatprep.subr.mxu0 0.0
        %319 = vmatpush1.msra.mxu0 0.0
        %320 = vmatprep.subr.mxu0 0.0
        %321 = vmatpush1.msra.mxu0 0.0
        %322 = vmatprep.subr.mxu0 0.0
        %323 = vmatpush1.msra.mxu0 0.0
        %324 = vmatprep.subr.mxu0 0.0
        %325 = vmatpush1.msra.mxu0 0.0
        %326 = vmatprep.subr.mxu0 0.0
        %327 = vmatpush1.msra.mxu0 0.0
        %328 = vmatprep.subr.mxu0 0.0
        %329 = vmatpush1.msra.mxu0 0.0
        %330 = vmatprep.subr.mxu0 0.0
        %331 = vmatpush1.msra.mxu0 0.0
        %332 = vmatprep.subr.mxu0 0.0
        %333 = vmatpush1.msra.mxu0 0.0
        %334 = vmatprep.subr.mxu0 0.0
        %335 = vmatpush1.msra.mxu0 0.0
        %336 = vmatprep.subr.mxu0 0.0
        %337 = vmatpush1.msra.mxu0 0.0
        %338 = vmatprep.subr.mxu0 0.0
        %339 = vmatpush1.msra.mxu0 0.0
        %340 = vmatprep.subr.mxu0 0.0
        %341 = vmatpush1.msra.mxu0 0.0
        %342 = vmatprep.subr.mxu0 0.0
        %343 = vmatpush1.msra.mxu0 0.0
        %344 = vmatprep.subr.mxu0 0.0
        %345 = vmatpush1.msra.mxu0 0.0
        %346 = vmatprep.subr.mxu0 0.0
        %347 = vmatpush1.msra.mxu0 0.0
        %348 = vmatprep.subr.mxu0 0.0
        %349 = vmatpush1.msra.mxu0 0.0
        %350 = vmatprep.subr.mxu0 0.0
        %351 = vmatpush1.msra.mxu0 0.0
        %352 = vmatprep.subr.mxu0 0.0
        %353 = vmatpush1.msra.mxu0 0.0
        %354 = vmatprep.subr.mxu0 0.0
        %355 = vmatpush1.msra.mxu0 0.0
        %356 = vmatprep.subr.mxu0 0.0
        %357 = vmatpush1.msra.mxu0 0.0
        %358 = vmatprep.subr.mxu0 0.0
        %359 = vmatpush1.msra.mxu0 0.0
        %360 = vmatprep.subr.mxu0 0.0
        %361 = vmatpush1.msra.mxu0 0.0
        %362 = vmatprep.subr.mxu0 0.0
        %363 = vmatpush1.msra.mxu0 0.0
        %364 = vmatprep.subr.mxu0 0.0
        %365 = vmatpush1.msra.mxu0 0.0
        %366 = vmatprep.subr.mxu0 0.0
        %367 = vmatpush1.msra.mxu0 0.0
        %368 = vmatprep.subr.mxu0 0.0
        %369 = vmatpush1.msra.mxu0 0.0
        %370 = vmatprep.subr.mxu0 0.0
        %371 = vmatpush1.msra.mxu0 0.0
        %372 = vmatprep.subr.mxu0 0.0
        %373 = vmatpush1.msra.mxu0 0.0
        %374 = vmatprep.mubr.f32.mxu0 0.0
        %375 = vmatmul.mubr.f32.gmra.mrb[0].mxu0 %v308
        %v376 = vpop.f32.mrb[0].mxu0
        %v377 = vadd.f32 0.0, %v376
        %v378 = vpop.f32.mrb[0].mxu0
        %379 = vdwg.mxu0
        %vm380 = vcmask 253952
        %381 = vst.msk [vmem:[%s133] sm:$0x1] %vm380, %v377
        %s382 = sand.u32 %s71, 1
        %s383 = scalar_lea.sflag [#allocation3], %s382
        %s384 = sand.u32 %s71, 1
        %s385 = scalar_lea.vmem [#allocation2], %s384
        // Predicated region
        $region29: #{global_attention_pool1d.1} parent=27 // pred_check
          %p386 = pneg %p81
        $region30: #{global_attention_pool1d.1} parent=27 // pred_check_branch
          %388 = sbr.rel (%p386) target = $region32
        $region31: #{global_attention_pool1d.1} parent=27 // pred_region
          %s390 = ssub.s32 16, 16
          %391 = vsyncadd %s383, %s390
          %s392 = smul.addr %s16, 16
          %s393 = scalar_lea.hbm %s2, %s392
          %s395 = sshll.u32 %s385, 4
          %s396 = int_to_ptr.vmem [resolvable:$true] %s395
          %398 = dma.vmem_to_hbm [thread:$0]  %s396, 16, %s393, %s383
        $region32: #{global_attention_pool1d.1} parent=27 // pred_fallthru
          _
      $region28: #{global_attention_pool1d.1} parent=5 // pred_fallthru
        _
      %p399 = scmp.le.s32.totalorder 2, %s11
      // Predicated region
      $region33: #{global_attention_pool1d.1} parent=5 // pred_check
        %p400 = pneg %p399
      $region34: #{global_attention_pool1d.1} parent=5 // pred_check_branch
        %402 = sbr.rel (%p400) target = $region36
      $region35: #{global_attention_pool1d.1} parent=5 // pred_region
        %s403 = ssub.s32 %s11, 2
        // Predicated region
        $region37: #{global_attention_pool1d.1} parent=35 // pred_check
          %p404 = pneg %p87
        $region38: #{global_attention_pool1d.1} parent=35 // pred_check_branch
          %406 = sbr.rel (%p404) target = $region40
        $region39: #{global_attention_pool1d.1} parent=35 // pred_region
          %s407 = sand.u32 %s72, 1
          %s408 = scalar_lea.sflag [#allocation3], %s407
          %s409 = sand.u32 %s72, 1
          %s410 = scalar_lea.vmem [#allocation2], %s409
          %411 = dma.done %s408, 16
        $region40: #{global_attention_pool1d.1} parent=35 // pred_fallthru
          _
      $region36: #{global_attention_pool1d.1} parent=5 // pred_fallthru
        _
    $region6: #{global_attention_pool1d.1} parent=1 // loop_footer
      %s15 = sadd.s32 1, %s11
    $region7: #{global_attention_pool1d.1} parent=1 // loop_footer_branch
      %10 = sbr.rel target = $region3
    $region8: #{global_attention_pool1d.1} parent=1 // loop_exit
      _
    %412 = vsyncpa [#allocation3], 1
    %s413 = scalar_lea.sflag [#allocation3], 1
    %414 = vsyncpa %s413, 1

</llo_original>
